<compile_context>
chip_gen: v7x
topology: tpu7x:2x2x1
jax: 0.10.0
libtpu: 0.0.40
codegen_flags: <defaults>
</compile_context>

<pallas_src>
import functools
import math

import jax
import jax.numpy as jnp
from jax.experimental import pallas as pl
from jax.experimental.pallas import tpu as pltpu


def _round_up(x: int, m: int) -> int:
    return ((x + m - 1) // m) * m


def _choose_tile_m(n: int, dtype_bytes: int) -> int:
    """Pick a row-tile size.

    Per-grid-step VMEM footprint ~ 2 * TILE_M * N * dtype   (double-buffered input)
                                 +     TILE_M * N * 4       (f32 working copy)
    Keep it under ~12 MiB so it fits v5e's 16 MiB default scoped VMEM and leaves
    plenty of headroom on v6e (32 MiB scoped) / v7x (64 MiB physical).
    """
    n8 = _round_up(n, 8)
    if n8 <= 256:
        # Single row tile; block dims equal the (padded) full array dims, so the
        # (8,128) divisibility rule is satisfied by the full-dim exemption.
        return n8
    budget = 12 * 1024 * 1024
    per_row = n8 * (2 * dtype_bytes + 4)
    tm = budget // max(per_row, 1)
    # Multi-tile: keep TILE_M a multiple of 128 so the (TILE_M, TILE_M) diagonal
    # sub-block satisfies the lane (128) divisibility rule.
    tm = (tm // 128) * 128
    return int(max(128, min(256, tm)))


def _mms_row_loss_kernel(row_ref, diag_ref, out_ref, *,
                         tile_m: int, margin: float, expm1_neg_margin: float):
    # row_ref : (tile_m, n_pad)  -- full-width row slab (input dtype)
    # diag_ref: (tile_m, tile_m) -- diagonal sub-block of this row slab
    # out_ref : (tile_m, 1)      -- per-row loss, f32
    s = row_ref[...].astype(jnp.float32)

    row_max = jnp.max(s, axis=1, keepdims=True)                       # (tile_m, 1)
    raw_sum = jnp.sum(jnp.exp(s - row_max), axis=1, keepdims=True)    # (tile_m, 1)

    # Diagonal extraction confined to the (tile_m, tile_m) sub-block.
    dblk = diag_ref[...].astype(jnp.float32)
    r_ids = jax.lax.broadcasted_iota(jnp.int32, (tile_m, tile_m), 0)
    c_ids = jax.lax.broadcasted_iota(jnp.int32, (tile_m, tile_m), 1)
    diag = jnp.sum(jnp.where(r_ids == c_ids, dblk, jnp.float32(0.0)),
                   axis=1, keepdims=True)                             # (tile_m, 1)

    # Fold the margin in analytically: replace exp(d - row_max) by
    # exp(d - margin - row_max) inside the sum.
    adj_sum = raw_sum + jnp.exp(diag - row_max) * jnp.float32(expm1_neg_margin)
    lse = row_max + jnp.log(adj_sum)

    out_ref[...] = lse - (diag - jnp.float32(margin))


def mms_loss(sims: jax.Array, margin: float = 0.001) -> jax.Array:
    """Pallas TPU implementation of MMSLoss.forward."""
    n, m = sims.shape
    assert n == m, "MMSLoss expects a square similarity matrix"

    if not jnp.issubdtype(sims.dtype, jnp.floating):
        sims = sims.astype(jnp.float32)
    dtype = sims.dtype
    dtype_bytes = jnp.dtype(dtype).itemsize

    tile_m = _choose_tile_m(n, dtype_bytes)
    n_pad = _round_up(n, tile_m)
    num_tiles = n_pad // tile_m

    if n_pad != n:
        # Pad with a huge-negative value: exp underflows to 0 so padded columns
        # do not perturb the logsumexp of valid rows; padded rows are discarded.
        pad_val = float(jnp.finfo(dtype).min)
        sims_p = jnp.pad(sims, ((0, n_pad - n), (0, n_pad - n)),
                         constant_values=pad_val)
    else:
        sims_p = sims

    kernel = functools.partial(
        _mms_row_loss_kernel,
        tile_m=tile_m,
        margin=float(margin),
        expm1_neg_margin=math.expm1(-float(margin)),
    )

    cost = pl.CostEstimate(
        flops=int(5 * n * n),
        transcendentals=int(n * n),
        bytes_accessed=int(n_pad * n_pad * dtype_bytes
                           + num_tiles * tile_m * tile_m * dtype_bytes
                           + n_pad * 4),
    )

    row_losses = pl.pallas_call(
        kernel,
        out_shape=jax.ShapeDtypeStruct((n_pad, 1), jnp.float32),
        grid=(num_tiles,),
        in_specs=[
            # Full-width row slab for this row tile.
            pl.BlockSpec((tile_m, n_pad), lambda i: (i, 0)),
            # Diagonal (tile_m, tile_m) sub-block of the same row tile.
            pl.BlockSpec((tile_m, tile_m), lambda i: (i, i)),
        ],
        out_specs=pl.BlockSpec((tile_m, 1), lambda i: (i, 0)),
        compiler_params=pltpu.CompilerParams(
            dimension_semantics=("parallel",),
            vmem_limit_bytes=32 * 1024 * 1024,
        ),
        cost_estimate=cost,
    )(sims_p, sims_p)

    # Mean over the true N rows (padded rows discarded).
    return jnp.sum(row_losses[:n, 0]) / jnp.float32(n)


def _mms_loss_ref(sims: jax.Array, margin: float = 0.001) -> jax.Array:
    """Pure-JAX reference (mirrors the PyTorch module)."""
    n = sims.shape[0]
    s = sims.astype(jnp.float32) - jnp.eye(n, dtype=jnp.float32) * margin
    logp = jax.nn.log_softmax(s, axis=1)
    return -jnp.mean(jnp.diagonal(logp))


if __name__ == "__main__":
    key = jax.random.PRNGKey(0)
    k1, k2 = jax.random.split(key)

    # Case 1: batch of 8 anchor/candidate pairs -> (8, 8) similarity matrix.
    sims1 = jax.random.normal(k1, (8, 8), dtype=jnp.float32)
    loss1 = mms_loss(sims1, margin=0.001)
    jax.block_until_ready(loss1)
    ref1 = _mms_loss_ref(sims1, margin=0.001)
    assert jnp.allclose(loss1, ref1, atol=1e-5, rtol=1e-5), (loss1, ref1)

    # Case 2: N=50 exercises the pad-to-multiple-of-8 path (padded columns
    # masked via huge-negative pad, padded rows sliced away).
    sims2 = jax.random.normal(k2, (50, 50), dtype=jnp.float32)
    loss2 = mms_loss(sims2, margin=0.001)
    jax.block_until_ready(loss2)
    ref2 = _mms_loss_ref(sims2, margin=0.001)
    assert jnp.allclose(loss2, ref2, atol=1e-5, rtol=1e-5), (loss2, ref2)

    print("KERNEL_OK")
</pallas_src>

<mosaic_0001>
module attributes {stable_mosaic.version = 11 : i64} {
  func.func @_mms_row_loss_kernel(%arg0: i32, %arg1: memref<8x8xf32, #tpu.memory_space<vmem>>, %arg2: memref<8x8xf32, #tpu.memory_space<vmem>>, %arg3: memref<8x1xf32, #tpu.memory_space<vmem>>) attributes {dimension_semantics = [#tpu.dimension_semantics<parallel>], iteration_bounds = array<i64: 1>, scalar_prefetch = 0 : i64, scratch_operands = 0 : i64, tpu.core_type = #tpu.core_type<tc>, window_params = [{transform_indices = @transform_0, window_bounds = array<i64: 8, 8>}, {transform_indices = @transform_1, window_bounds = array<i64: 8, 8>}, {transform_indices = @transform_2, window_bounds = array<i64: 8, 1>}]} {
    %c0 = arith.constant 0 : index
    %c0_0 = arith.constant 0 : index
    %0 = vector.load %arg1[%c0, %c0_0] : memref<8x8xf32, #tpu.memory_space<vmem>>, vector<8x8xf32>
    %cst = arith.constant dense<0xFF800000> : vector<8xf32>
    %1 = vector.multi_reduction <maximumf>, %0, %cst [1] : vector<8x8xf32> to vector<8xf32>
    %2 = vector.shape_cast %1 : vector<8xf32> to vector<8x1xf32>
    %3 = vector.broadcast %2 : vector<8x1xf32> to vector<8x8xf32>
    %4 = arith.subf %0, %3 : vector<8x8xf32>
    %5 = math.exp %4 : vector<8x8xf32>
    %cst_1 = arith.constant dense<0.000000e+00> : vector<8xf32>
    %6 = vector.multi_reduction <add>, %5, %cst_1 [1] : vector<8x8xf32> to vector<8xf32>
    %7 = vector.shape_cast %6 : vector<8xf32> to vector<8x1xf32>
    %c0_2 = arith.constant 0 : index
    %c0_3 = arith.constant 0 : index
    %8 = vector.load %arg2[%c0_2, %c0_3] : memref<8x8xf32, #tpu.memory_space<vmem>>, vector<8x8xf32>
    %9 = tpu.iota {dimensions = array<i32: 0>} : vector<8x8xi32>
    %10 = tpu.iota {dimensions = array<i32: 1>} : vector<8x8xi32>
    %11 = arith.cmpi eq, %9, %10 : vector<8x8xi32>
    %cst_4 = arith.constant 0.000000e+00 : f32
    %12 = vector.broadcast %cst_4 : f32 to vector<8x8xf32>
    %13 = arith.select %11, %8, %12 : vector<8x8xi1>, vector<8x8xf32>
    %cst_5 = arith.constant dense<0.000000e+00> : vector<8xf32>
    %14 = vector.multi_reduction <add>, %13, %cst_5 [1] : vector<8x8xf32> to vector<8xf32>
    %15 = vector.shape_cast %14 : vector<8xf32> to vector<8x1xf32>
    %16 = arith.subf %15, %2 : vector<8x1xf32>
    %17 = math.exp %16 : vector<8x1xf32>
    %cst_6 = arith.constant -9.9950016E-4 : f32
    %18 = vector.broadcast %cst_6 : f32 to vector<8x1xf32>
    %19 = arith.mulf %17, %18 : vector<8x1xf32>
    %20 = arith.addf %7, %19 : vector<8x1xf32>
    %21 = math.log %20 : vector<8x1xf32>
    %22 = arith.addf %2, %21 : vector<8x1xf32>
    %cst_7 = arith.constant 1.000000e-03 : f32
    %23 = vector.broadcast %cst_7 : f32 to vector<8x1xf32>
    %24 = arith.subf %15, %23 : vector<8x1xf32>
    %25 = arith.subf %22, %24 : vector<8x1xf32>
    %c0_8 = arith.constant 0 : index
    %c0_9 = arith.constant 0 : index
    %26 = vector.load %arg3[%c0_8, %c0_9] : memref<8x1xf32, #tpu.memory_space<vmem>>, vector<8x1xf32>
    tpu.vector_store %arg3[%c0_8, %c0_9], %25 {strides = array<i32>} : memref<8x1xf32, #tpu.memory_space<vmem>>, vector<8x1xf32>,
    return
  }
  func.func @transform_0(%arg0: i32) -> (i32, i32) {
    %c0_i32 = arith.constant 0 : i32
    %c0_i32_0 = arith.constant 0 : i32
    return %arg0, %c0_i32 : i32, i32
  }
  func.func @transform_1(%arg0: i32) -> (i32, i32) {
    %c0_i32 = arith.constant 0 : i32
    return %arg0, %arg0 : i32, i32
  }
  func.func @transform_2(%arg0: i32) -> (i32, i32) {
    %c0_i32 = arith.constant 0 : i32
    %c0_i32_0 = arith.constant 0 : i32
    return %arg0, %c0_i32 : i32, i32
  }
}

</mosaic_0001>

<llo_original>
// kernel: tpu_custom_call.1
$region0: #{tpu_custom_call.1}
  #allocation0 [shape = 'u32[]', space=smem, size = 0x4, offset = 0x4, fixed_abs, tag = 'smem constant byte address 0x4 - core index']
  #allocation1 [shape = 'u32[144,128]{1,0:T(1,128)}', space=vmem, size = 0x12000, scoped, tag = 'internal scratch']
  %s0 = inlined_call_operand.hbm [shape: f32[8,8], index: 0, kind: input, shape index: {}]
  %s1 = inlined_call_operand.hbm [shape: f32[8,8], index: 1, kind: input, shape index: {}]
  %s2 = inlined_call_operand.vmem [shape: f32[8,1], index: 2, kind: output, shape index: {}]
  %s3 = sld [smem:[#allocation0]]
  $region26: #{tpu_custom_call.1} parent=0
    _
  %s5 = ssub.s32 1, %s3
  %s6 = scalar_select 0, %s5, %s3
  $region1: #{tpu_custom_call.1} parent=0
    #allocation2 [shape = 'u8[4096]{0}', space=vmem, size = 0x1000, scoped, tag = 'input window, operand 0, single buffered']
    #allocation3 [shape = 's32[1]{0}', space=sflag, size = 0x4, scoped, tag = 'scoped memory for tpu_custom_call.1']
    #allocation4 [shape = 'u8[4096]{0}', space=vmem, size = 0x1000, scoped, tag = 'input window, operand 1, single buffered']
    #allocation5 [shape = 's32[1]{0}', space=sflag, size = 0x4, scoped, tag = 'scoped memory for tpu_custom_call.1']
    %7 = vsyncpa [#allocation3], 0
    %8 = vsyncpa [#allocation5], 0
    // Predicated region
    $region2: #{tpu_custom_call.1} parent=1 // pred_check
      _
    $region3: #{tpu_custom_call.1} parent=1 // pred_check_branch
      %10 = sbr.rel (0) target = $region5
    $region4: #{tpu_custom_call.1} parent=1 // pred_region
      %s12 = ssub.s32 128, 128
      %13 = vsyncadd [#allocation3], %s12
      %s15 = sshll.u32 [#allocation2], 4
      %s16 = int_to_ptr.vmem [resolvable:$true] %s15
      %18 = dma.hbm_to_vmem [thread:$0]  %s0, 128, %s16, [#allocation3]
    $region5: #{tpu_custom_call.1} parent=1 // pred_fallthru
      _
    // Predicated region
    $region6: #{tpu_custom_call.1} parent=1 // pred_check
      _
    $region7: #{tpu_custom_call.1} parent=1 // pred_check_branch
      %20 = sbr.rel (0) target = $region9
    $region8: #{tpu_custom_call.1} parent=1 // pred_region
      %s22 = ssub.s32 128, 128
      %23 = vsyncadd [#allocation5], %s22
      %s25 = sshll.u32 [#allocation4], 4
      %s26 = int_to_ptr.vmem [resolvable:$true] %s25
      %28 = dma.hbm_to_vmem [thread:$0]  %s1, 128, %s26, [#allocation5]
    $region9: #{tpu_custom_call.1} parent=1 // pred_fallthru
      _
    // Predicated region
    $region10: #{tpu_custom_call.1} parent=1 // pred_check
      _
    $region11: #{tpu_custom_call.1} parent=1 // pred_check_branch
      %30 = sbr.rel (0) target = $region13
    $region12: #{tpu_custom_call.1} parent=1 // pred_region
      %31 = dma.done [#allocation3], 128
    $region13: #{tpu_custom_call.1} parent=1 // pred_fallthru
      _
    // Predicated region
    $region14: #{tpu_custom_call.1} parent=1 // pred_check
      _
    $region15: #{tpu_custom_call.1} parent=1 // pred_check_branch
      %33 = sbr.rel (0) target = $region17
    $region16: #{tpu_custom_call.1} parent=1 // pred_region
      %34 = dma.done [#allocation5], 128
    $region17: #{tpu_custom_call.1} parent=1 // pred_fallthru
      _
    %v35 = vld [vmem:[#allocation2] sm:$0xff]
    %vm36 = vcmask 64512
    %v37 = vsel %vm36, %v35, -inf
    %38 = vmax.xlane.f32.xlu0 %v37
    %v39 = vpop.xlane.xlu0 %38
    %v40 = vsub.f32 %v35, %v39
    %v41 = vmul.f32 %v40, 1.442695
    %v42 = vpow.pop %v41
    %v43 = vsel %vm36, %v42, 0.0
    %44 = vadd.xlane.f32.xlu0 %v43
    %v45 = vpop.xlane.xlu0 %44
    %v46 = vld [vmem:[#allocation4] sm:$0xff]
    %v47 = vlaneseq
    %v48 = vshrl.u32 %v47, 7
    %v49 = vlaneseq
    %v50 = vand.u32 %v49, 127
    %vm51 = vcmp.eq.s32.totalorder %v48, %v50
    %v52 = vsel %vm51, %v46, 0.0
    %v53 = vsel %vm36, %v52, 0.0
    %54 = vadd.xlane.f32.xlu0 %v53
    %v55 = vpop.xlane.xlu0 %54
    %v56 = vsub.f32 %v55, %v39
    %v57 = vmul.f32 %v56, 1.442695
    %v58 = vpow.pop %v57
    %v59 = vmul.f32 %v58, -0.0009995002
    %v60 = vadd.f32 %v45, %v59
    %v61 = vlog2.pop %v60
    %v62 = vmul.f32 %v61, 0.6931472
    %v63 = vadd.f32 %v39, %v62
    %v64 = vsub.f32 %v55, 0.001
    %v65 = vsub.f32 %v63, %v64
    %vm66 = vcmask 7168
    %67 = vst.msk [vmem:[%s2] sm:$0xff] %vm66, %v65
    // Predicated region
    $region18: #{tpu_custom_call.1} parent=1 // pred_check
      _
    $region19: #{tpu_custom_call.1} parent=1 // pred_check_branch
      %69 = sbr.rel (0) target = $region21
    $region20: #{tpu_custom_call.1} parent=1 // pred_region
      _
    $region21: #{tpu_custom_call.1} parent=1 // pred_fallthru
      _
    // Predicated region
    $region22: #{tpu_custom_call.1} parent=1 // pred_check
      _
    $region23: #{tpu_custom_call.1} parent=1 // pred_check_branch
      %71 = sbr.rel (0) target = $region25
    $region24: #{tpu_custom_call.1} parent=1 // pred_region
      _
    $region25: #{tpu_custom_call.1} parent=1 // pred_fallthru
      _
    %72 = vsyncpa [#allocation3], 1
    %73 = vsyncpa [#allocation5], 1

</llo_original>
